<compile_context>
chip_gen: v6e
topology: v6e:2x2x1
jax: 0.10.0
libtpu: 0.0.40
codegen_flags: <defaults>
</compile_context>

<pallas_src>
import functools

import jax
import jax.numpy as jnp
from jax import lax
from jax.experimental import pallas as pl
from jax.experimental.pallas import tpu as pltpu

LANES = 128
MAX_BLOCK_ROWS = 4096            # 4096 x 128 x 4 B = 2 MiB per input per buffer
VMEM_LIMIT_BYTES = 32 * 1024 * 1024

# Tail-pad values: exp(-200) underflows to 0 in f32, so a padded element's
# focal term is exactly 0 for every gamma >= 0 (no lane-level mask needed).
_PAD_LOGIT = 200.0
_PAD_TARGET = 1.0


def _round_up(x, m):
    return -(-x // m) * m


def _focal_loss_kernel(x_ref, y_ref, out_ref, acc_ref, *,
                       gamma, rows, block_rows, steps_per_core, full_blocks):
    """Grid = (core, step); axis 1 is the sequential ('arbitrary') reduction."""
    c = pl.program_id(0)
    k = pl.program_id(1)

    @pl.when(k == 0)
    def _init():
        acc_ref[...] = jnp.zeros_like(acc_ref)

    x = x_ref[...].astype(jnp.float32)   # logits tile
    y = y_ref[...].astype(jnp.float32)   # targets tile

    # Shared-exp formulation:
    #   e              = exp(-|x|)
    #   1 - sigmoid(x) = e / (1 + e)  (x >= 0)   |   1 / (1 + e)  (x < 0)
    #   BCEWithLogits  = max(x, 0) - x*y + log1p(e)
    e = jnp.exp(-jnp.abs(x))
    one_minus_p = jnp.where(x >= 0.0, e, 1.0) / (1.0 + e)
    bce = jnp.maximum(x, 0.0) - x * y + jnp.log1p(e)

    g_f = float(gamma)
    if g_f == 2.0:                                   # default: explicit square
        mod = one_minus_p * one_minus_p
    elif g_f.is_integer():                           # any integral gamma
        mod = lax.integer_pow(one_minus_p, int(g_f))
    else:                                            # float gamma: avoid log(0)
        mod = jnp.power(jnp.maximum(one_minus_p, jnp.float32(1e-30)),
                        jnp.float32(g_f))

    focal = mod * bce

    def _accumulate(vals):
        # Two-stage reduction: 8 independent accumulation chains (VPU ILP)
        # for large blocks, single-stage sum for small ones.
        if block_rows % 64 == 0 and block_rows >= 128:
            part = vals.reshape(block_rows // 64, 64, LANES).sum(axis=0)
            acc_ref[...] += part.reshape(8, 8, LANES).sum(axis=0)
        else:
            acc_ref[...] += vals.reshape(block_rows // 8, 8, LANES).sum(axis=0)

    logical_block = c * steps_per_core + k

    # Fully-valid blocks: no mask at all.
    @pl.when(logical_block < full_blocks)
    def _bulk():
        _accumulate(focal)

    # Boundary / duplicated blocks: zero out rows beyond the real data.
    # Row-level compare keeps int32 safe up to ~2**38 elements.
    @pl.when(logical_block >= full_blocks)
    def _tail():
        row = lax.broadcasted_iota(jnp.int32, (block_rows, LANES), 0)
        global_row = logical_block * block_rows + row
        _accumulate(jnp.where(global_row < rows, focal, 0.0))

    @pl.when(k == pl.num_programs(1) - 1)
    def _finalize():
        out_ref[...] = acc_ref[...]


def binary_focal_loss_with_logits(y_pred, y_true, gamma=2, *,
                                  max_block_rows=MAX_BLOCK_ROWS):
    """mean((1 - sigmoid(y_pred))**gamma * BCEWithLogits(y_pred, y_true)).

    Inputs keep their dtype (f32 or bf16); math runs in f32 in-kernel.
    """
    assert y_pred.shape == y_true.shape
    assert max_block_rows % 16 == 0
    n = int(y_pred.size)
    assert n > 0

    rows = -(-n // LANES)
    pad = rows * LANES - n

    xf = y_pred.reshape(-1)
    yf = y_true.reshape(-1)
    if pad:
        # Lane-unaligned n only: pad the flat tail with values whose focal
        # term is exactly 0.  For the common conv-map case (n % 128 == 0) this
        # branch is skipped and the reshape below is a free bitcast (no copy).
        xf = jnp.pad(xf, (0, pad), constant_values=_PAD_LOGIT)
        yf = jnp.pad(yf, (0, pad), constant_values=_PAD_TARGET)
    x2d = xf.reshape(rows, LANES)
    y2d = yf.reshape(rows, LANES)

    block_rows = min(max_block_rows, _round_up(rows, 16))
    n_blocks = -(-rows // block_rows)
    full_blocks = rows // block_rows          # blocks with no padded rows
    num_cores = 2 if n_blocks >= 2 else 1     # leading "parallel" axis
    steps_per_core = -(-n_blocks // num_cores)

    kernel = functools.partial(
        _focal_loss_kernel, gamma=gamma, rows=rows, block_rows=block_rows,
        steps_per_core=steps_per_core, full_blocks=full_blocks)

    # Clamp out-of-range logical blocks (odd block count over 2 cores) onto
    # the last real block; the in-kernel row mask zeroes their contribution.
    def in_index(c, k):
        return (jnp.minimum(c * steps_per_core + k, n_blocks - 1), 0)

    in_spec = pl.BlockSpec((block_rows, LANES), in_index)

    bytes_accessed = (x2d.size * x2d.dtype.itemsize
                      + y2d.size * y2d.dtype.itemsize
                      + num_cores * 8 * LANES * 4)
    cost = pl.CostEstimate(flops=15 * n, transcendentals=2 * n,
                           bytes_accessed=bytes_accessed)

    partials = pl.pallas_call(
        kernel,
        out_shape=jax.ShapeDtypeStruct((num_cores * 8, LANES), jnp.float32),
        grid_spec=pltpu.PrefetchScalarGridSpec(
            num_scalar_prefetch=0,
            grid=(num_cores, steps_per_core),
            in_specs=[in_spec, in_spec],
            out_specs=pl.BlockSpec((8, LANES), lambda c, k: (c, 0)),
            scratch_shapes=[pltpu.VMEM((8, LANES), jnp.float32)],
        ),
        compiler_params=pltpu.CompilerParams(
            dimension_semantics=("parallel", "arbitrary"),
            vmem_limit_bytes=VMEM_LIMIT_BYTES),
        cost_estimate=cost,
    )(x2d, y2d)

    # Final scalar reduce of the tiny per-core partial slab; mean over the
    # ORIGINAL element count (pad values / garbage rows contribute exactly 0).
    return jnp.sum(partials) / jnp.float32(n)


def _reference(y_pred, y_true, gamma=2):
    x = y_pred.astype(jnp.float32)
    y = y_true.astype(jnp.float32)
    p = jax.nn.sigmoid(x)
    bce = jnp.maximum(x, 0.0) - x * y + jnp.log1p(jnp.exp(-jnp.abs(x)))
    return jnp.mean(jnp.power(1.0 - p, gamma) * bce)


if __name__ == "__main__":
    key = jax.random.PRNGKey(0)
    k1, k2 = jax.random.split(key)

    # NCHW inputs, as the PyTorch module would receive from a conv net.
    shape = (2, 4, 16, 16)
    y_pred = jax.random.normal(k1, shape, dtype=jnp.float32) * 2.0
    y_true = (jax.random.uniform(k2, shape) > 0.5).astype(jnp.float32)

    loss = binary_focal_loss_with_logits(y_pred, y_true, gamma=2)
    loss = jax.block_until_ready(loss)
    ref = _reference(y_pred, y_true, gamma=2)
    assert jnp.allclose(loss, ref, atol=1e-5, rtol=1e-5), (loss, ref)

    # Lane-unaligned element count -> zero-contribution tail padding, a
    # partial boundary block, odd block count over the 2-wide core axis, and
    # multi-step accumulation (small max_block_rows forces several steps).
    k3, k4 = jax.random.split(k1)
    shape2 = (3, 5, 33, 37)
    y_pred2 = jax.random.normal(k3, shape2, dtype=jnp.float32) * 3.0
    y_true2 = (jax.random.uniform(k4, shape2) > 0.5).astype(jnp.float32)
    loss2 = binary_focal_loss_with_logits(y_pred2, y_true2, gamma=2,
                                          max_block_rows=16)
    loss2 = jax.block_until_ready(loss2)
    ref2 = _reference(y_pred2, y_true2, gamma=2)
    assert jnp.allclose(loss2, ref2, atol=1e-5, rtol=1e-5), (loss2, ref2)

    # bf16 inputs (halves HBM bytes/element): exact for 0/1 targets, math f32.
    y_pred3 = y_pred.astype(jnp.bfloat16)
    y_true3 = y_true.astype(jnp.bfloat16)
    loss3 = binary_focal_loss_with_logits(y_pred3, y_true3, gamma=2)
    loss3 = jax.block_until_ready(loss3)
    ref3 = _reference(y_pred3, y_true3, gamma=2)
    assert jnp.allclose(loss3, ref3, atol=1e-5, rtol=1e-5), (loss3, ref3)

    print("KERNEL_OK")
</pallas_src>

<mosaic_0001>
module attributes {stable_mosaic.version = 11 : i64} {
  func.func @_focal_loss_kernel(%arg0: i32, %arg1: i32, %arg2: memref<16x128xf32, #tpu.memory_space<vmem>>, %arg3: memref<16x128xf32, #tpu.memory_space<vmem>>, %arg4: memref<8x128xf32, #tpu.memory_space<vmem>>, %arg5: memref<8x128xf32, #tpu.memory_space<vmem>>) attributes {dimension_semantics = [#tpu.dimension_semantics<parallel>, #tpu.dimension_semantics<arbitrary>], iteration_bounds = array<i64: 1, 1>, scalar_prefetch = 0 : i64, scratch_operands = 1 : i64, tpu.core_type = #tpu.core_type<tc>, window_params = [{transform_indices = @transform_0, window_bounds = array<i64: 16, 128>}, {transform_indices = @transform_1, window_bounds = array<i64: 16, 128>}, {transform_indices = @transform_2, window_bounds = array<i64: 8, 128>}]} {
    %c0_i32 = arith.constant 0 : i32
    %0 = arith.cmpi eq, %arg1, %c0_i32 : i32
    %1 = arith.extui %0 : i1 to i32
    %c0_i32_0 = arith.constant 0 : i32
    %2 = arith.cmpi ne, %1, %c0_i32_0 : i32
    scf.if %2 {
      %cst_14 = arith.constant 0.000000e+00 : f32
      %35 = vector.broadcast %cst_14 : f32 to vector<8x128xf32>
      %c0_15 = arith.constant 0 : index
      %c0_16 = arith.constant 0 : index
      %36 = vector.load %arg5[%c0_15, %c0_16] : memref<8x128xf32, #tpu.memory_space<vmem>>, vector<8x128xf32>
      tpu.vector_store %arg5[%c0_15, %c0_16], %35 {strides = array<i32>} : memref<8x128xf32, #tpu.memory_space<vmem>>, vector<8x128xf32>,
    } else {
    }
    %c0 = arith.constant 0 : index
    %c0_1 = arith.constant 0 : index
    %3 = vector.load %arg2[%c0, %c0_1] : memref<16x128xf32, #tpu.memory_space<vmem>>, vector<16x128xf32>
    %c0_2 = arith.constant 0 : index
    %c0_3 = arith.constant 0 : index
    %4 = vector.load %arg3[%c0_2, %c0_3] : memref<16x128xf32, #tpu.memory_space<vmem>>, vector<16x128xf32>
    %5 = math.absf %3 : vector<16x128xf32>
    %cst = arith.constant 0.000000e+00 : f32
    %6 = vector.broadcast %cst : f32 to vector<16x128xf32>
    %7 = arith.subf %6, %5 : vector<16x128xf32>
    %8 = math.exp %7 : vector<16x128xf32>
    %cst_4 = arith.constant 0.000000e+00 : f32
    %9 = vector.broadcast %cst_4 : f32 to vector<16x128xf32>
    %10 = arith.cmpf oge, %3, %9 : vector<16x128xf32>
    %cst_5 = arith.constant 1.000000e+00 : f32
    %11 = vector.broadcast %cst_5 : f32 to vector<16x128xf32>
    %12 = arith.select %10, %8, %11 : vector<16x128xi1>, vector<16x128xf32>
    %cst_6 = arith.constant 1.000000e+00 : f32
    %13 = vector.broadcast %cst_6 : f32 to vector<16x128xf32>
    %14 = arith.addf %13, %8 : vector<16x128xf32>
    %15 = arith.divf %12, %14 : vector<16x128xf32>
    %cst_7 = arith.constant 0.000000e+00 : f32
    %16 = vector.broadcast %cst_7 : f32 to vector<16x128xf32>
    %17 = arith.maximumf %3, %16 : vector<16x128xf32>
    %18 = arith.mulf %3, %4 : vector<16x128xf32>
    %19 = arith.subf %17, %18 : vector<16x128xf32>
    %20 = math.log1p %8 : vector<16x128xf32>
    %21 = arith.addf %19, %20 : vector<16x128xf32>
    %22 = arith.mulf %15, %15 : vector<16x128xf32>
    %23 = arith.mulf %22, %21 : vector<16x128xf32>
    %c1_i32 = arith.constant 1 : i32
    %24 = arith.muli %arg0, %c1_i32 : i32
    %25 = arith.addi %24, %arg1 : i32
    %c1_i32_8 = arith.constant 1 : i32
    %26 = arith.cmpi slt, %25, %c1_i32_8 : i32
    %27 = arith.extui %26 : i1 to i32
    %c0_i32_9 = arith.constant 0 : i32
    %28 = arith.cmpi ne, %27, %c0_i32_9 : i32
    scf.if %28 {
      %c0_14 = arith.constant 0 : index
      %c0_15 = arith.constant 0 : index
      %35 = vector.load %arg5[%c0_14, %c0_15] : memref<8x128xf32, #tpu.memory_space<vmem>>, vector<8x128xf32>
      %36 = vector.shape_cast %23 : vector<16x128xf32> to vector<2x8x128xf32>
      %cst_16 = arith.constant dense<0.000000e+00> : vector<8x128xf32>
      %37 = vector.multi_reduction <add>, %36, %cst_16 [0] : vector<2x8x128xf32> to vector<8x128xf32>
      %38 = arith.addf %35, %37 : vector<8x128xf32>
      %c0_17 = arith.constant 0 : index
      %c0_18 = arith.constant 0 : index
      %39 = vector.load %arg5[%c0_17, %c0_18] : memref<8x128xf32, #tpu.memory_space<vmem>>, vector<8x128xf32>
      tpu.vector_store %arg5[%c0_17, %c0_18], %38 {strides = array<i32>} : memref<8x128xf32, #tpu.memory_space<vmem>>, vector<8x128xf32>,
    } else {
    }
    %c1_i32_10 = arith.constant 1 : i32
    %29 = arith.cmpi sge, %25, %c1_i32_10 : i32
    %30 = arith.extui %29 : i1 to i32
    %c0_i32_11 = arith.constant 0 : i32
    %31 = arith.cmpi ne, %30, %c0_i32_11 : i32
    scf.if %31 {
      %35 = tpu.iota {dimensions = array<i32: 0>} : vector<16x128xi32>
      %c16_i32 = arith.constant 16 : i32
      %36 = arith.muli %25, %c16_i32 : i32
      %37 = vector.broadcast %36 : i32 to vector<16x128xi32>
      %38 = arith.addi %37, %35 : vector<16x128xi32>
      %c16_i32_14 = arith.constant 16 : i32
      %39 = vector.broadcast %c16_i32_14 : i32 to vector<16x128xi32>
      %40 = arith.cmpi slt, %38, %39 : vector<16x128xi32>
      %cst_15 = arith.constant 0.000000e+00 : f32
      %41 = vector.broadcast %cst_15 : f32 to vector<16x128xf32>
      %42 = arith.select %40, %23, %41 : vector<16x128xi1>, vector<16x128xf32>
      %c0_16 = arith.constant 0 : index
      %c0_17 = arith.constant 0 : index
      %43 = vector.load %arg5[%c0_16, %c0_17] : memref<8x128xf32, #tpu.memory_space<vmem>>, vector<8x128xf32>
      %44 = vector.shape_cast %42 : vector<16x128xf32> to vector<2x8x128xf32>
      %cst_18 = arith.constant dense<0.000000e+00> : vector<8x128xf32>
      %45 = vector.multi_reduction <add>, %44, %cst_18 [0] : vector<2x8x128xf32> to vector<8x128xf32>
      %46 = arith.addf %43, %45 : vector<8x128xf32>
      %c0_19 = arith.constant 0 : index
      %c0_20 = arith.constant 0 : index
      %47 = vector.load %arg5[%c0_19, %c0_20] : memref<8x128xf32, #tpu.memory_space<vmem>>, vector<8x128xf32>
      tpu.vector_store %arg5[%c0_19, %c0_20], %46 {strides = array<i32>} : memref<8x128xf32, #tpu.memory_space<vmem>>, vector<8x128xf32>,
    } else {
    }
    %c0_i32_12 = arith.constant 0 : i32
    %32 = arith.cmpi eq, %arg1, %c0_i32_12 : i32
    %33 = arith.extui %32 : i1 to i32
    %c0_i32_13 = arith.constant 0 : i32
    %34 = arith.cmpi ne, %33, %c0_i32_13 : i32
    scf.if %34 {
      %c0_14 = arith.constant 0 : index
      %c0_15 = arith.constant 0 : index
      %35 = vector.load %arg5[%c0_14, %c0_15] : memref<8x128xf32, #tpu.memory_space<vmem>>, vector<8x128xf32>
      %c0_16 = arith.constant 0 : index
      %c0_17 = arith.constant 0 : index
      %36 = vector.load %arg4[%c0_16, %c0_17] : memref<8x128xf32, #tpu.memory_space<vmem>>, vector<8x128xf32>
      tpu.vector_store %arg4[%c0_16, %c0_17], %35 {strides = array<i32>} : memref<8x128xf32, #tpu.memory_space<vmem>>, vector<8x128xf32>,
    } else {
    }
    return
  }
  func.func @transform_0(%arg0: i32, %arg1: i32) -> (i32, i32) {
    %c1_i32 = arith.constant 1 : i32
    %0 = arith.muli %arg0, %c1_i32 : i32
    %1 = arith.addi %0, %arg1 : i32
    %c0_i32 = arith.constant 0 : i32
    %2 = arith.minsi %1, %c0_i32 : i32
    %c0_i32_0 = arith.constant 0 : i32
    %c0_i32_1 = arith.constant 0 : i32
    return %2, %c0_i32_0 : i32, i32
  }
  func.func @transform_1(%arg0: i32, %arg1: i32) -> (i32, i32) {
    %c1_i32 = arith.constant 1 : i32
    %0 = arith.muli %arg0, %c1_i32 : i32
    %1 = arith.addi %0, %arg1 : i32
    %c0_i32 = arith.constant 0 : i32
    %2 = arith.minsi %1, %c0_i32 : i32
    %c0_i32_0 = arith.constant 0 : i32
    %c0_i32_1 = arith.constant 0 : i32
    return %2, %c0_i32_0 : i32, i32
  }
  func.func @transform_2(%arg0: i32, %arg1: i32) -> (i32, i32) {
    %c0_i32 = arith.constant 0 : i32
    %c0_i32_0 = arith.constant 0 : i32
    return %arg0, %c0_i32 : i32, i32
  }
}

</mosaic_0001>

<llo_original>
// kernel: tpu_custom_call.1
$region0: #{tpu_custom_call.1}
  #allocation0 [shape = 'u32[]', space=smem, size = 0x4, offset = 0x4, fixed_abs, tag = 'smem constant byte address 0x4 - core index']
  #allocation1 [shape = 'u32[144,128]{1,0:T(1,128)}', space=vmem, size = 0x12000, scoped, tag = 'internal scratch']
  #allocation2 [shape = 'f32[8,128]{1,0:T(8,128)}', space=vmem, size = 0x1000, scoped, tag = 'scratch operand']
  %s0 = inlined_call_operand.hbm [shape: f32[16,128], index: 0, kind: input, shape index: {}]
  %s1 = inlined_call_operand.hbm [shape: f32[16,128], index: 1, kind: input, shape index: {}]
  %s2 = inlined_call_operand.hbm [shape: f32[8,128], index: 2, kind: output, shape index: {}]
  %s3 = sld [smem:[#allocation0]]
  $region42: #{tpu_custom_call.1} parent=0
    _
  %s5 = ssub.s32 1, %s3
  %s6 = scalar_select 0, %s5, %s3
  $region1: #{tpu_custom_call.1} parent=0
    #allocation3 [shape = 'u8[8192]{0}', space=vmem, size = 0x2000, scoped, tag = 'input window, operand 0, single buffered']
    #allocation4 [shape = 's32[1]{0}', space=sflag, size = 0x4, scoped, tag = 'scoped memory for tpu_custom_call.1']
    #allocation5 [shape = 's32[1]{0}', space=sflag, size = 0x4, scoped, tag = 'scoped memory for tpu_custom_call.1']
    #allocation6 [shape = 'u8[8192]{0}', space=vmem, size = 0x2000, scoped, tag = 'input window, operand 1, single buffered']
    #allocation7 [shape = 's32[1]{0}', space=sflag, size = 0x4, scoped, tag = 'scoped memory for tpu_custom_call.1']
    #allocation8 [shape = 'u8[4096]{0}', space=vmem, size = 0x1000, scoped, tag = 'output window, operand 0, single buffered']
    %7 = vsyncpa [#allocation4], 0
    %8 = vsyncpa [#allocation7], 0
    %9 = vsyncpa [#allocation5], 0
    // Predicated region
    $region2: #{tpu_custom_call.1} parent=1 // pred_check
      _
    $region3: #{tpu_custom_call.1} parent=1 // pred_check_branch
      %11 = sbr.rel (0) target = $region5
    $region4: #{tpu_custom_call.1} parent=1 // pred_region
      %s12 = sadd.s32 0, 0
      %p13 = scmp.lt.s32.totalorder %s12, 0
      %s14 = scalar_select %p13, %s12, 0
      %s15 = smul.u32 2, %s14
      %s17 = ssub.s32 256, 256
      %18 = vsyncadd [#allocation4], %s17
      %s19 = smul.addr %s15, 128
      %s20 = scalar_lea.hbm %s0, %s19
      %s21 = sshll.u32 [#allocation3], 4
      %s22 = int_to_ptr.vmem [resolvable:$true] %s21
      %27 = dma.hbm_to_vmem [thread:$0]  %s20, 256, %s22, [#allocation4], 128, 128, 8
    $region5: #{tpu_custom_call.1} parent=1 // pred_fallthru
      _
    // Predicated region
    $region6: #{tpu_custom_call.1} parent=1 // pred_check
      _
    $region7: #{tpu_custom_call.1} parent=1 // pred_check_branch
      %29 = sbr.rel (0) target = $region9
    $region8: #{tpu_custom_call.1} parent=1 // pred_region
      %s30 = sadd.s32 0, 0
      %p31 = scmp.lt.s32.totalorder %s30, 0
      %s32 = scalar_select %p31, %s30, 0
      %s33 = smul.u32 2, %s32
      %s35 = ssub.s32 256, 256
      %36 = vsyncadd [#allocation7], %s35
      %s37 = smul.addr %s33, 128
      %s38 = scalar_lea.hbm %s1, %s37
      %s39 = sshll.u32 [#allocation6], 4
      %s40 = int_to_ptr.vmem [resolvable:$true] %s39
      %45 = dma.hbm_to_vmem [thread:$0]  %s38, 256, %s40, [#allocation7], 128, 128, 8
    $region9: #{tpu_custom_call.1} parent=1 // pred_fallthru
      _
    // Predicated region
    $region10: #{tpu_custom_call.1} parent=1 // pred_check
      _
    $region11: #{tpu_custom_call.1} parent=1 // pred_check_branch
      %47 = sbr.rel (0) target = $region13
    $region12: #{tpu_custom_call.1} parent=1 // pred_region
      %48 = dma.done [#allocation4], 256
    $region13: #{tpu_custom_call.1} parent=1 // pred_fallthru
      _
    // Predicated region
    $region14: #{tpu_custom_call.1} parent=1 // pred_check
      _
    $region15: #{tpu_custom_call.1} parent=1 // pred_check_branch
      %50 = sbr.rel (0) target = $region17
    $region16: #{tpu_custom_call.1} parent=1 // pred_region
      %51 = dma.done [#allocation7], 256
    $region17: #{tpu_custom_call.1} parent=1 // pred_fallthru
      _
    %s52 = sadd.s32 0, 0
    %p53 = scmp.lt.s32.totalorder %s52, 0
    %s54 = scalar_select %p53, %s52, 0
    %s55 = smul.u32 2, %s54
    %s56 = sadd.s32 0, 0
    %p57 = scmp.lt.s32.totalorder %s56, 0
    %s58 = scalar_select %p57, %s56, 0
    %s59 = smul.u32 2, %s58
    %p60 = scmp.eq.s32.totalorder 0, 0
    // Predicated region
    $region18: #{tpu_custom_call.1} parent=1 // pred_check
      %p61 = pneg %p60
    $region19: #{tpu_custom_call.1} parent=1 // pred_check_branch
      %63 = sbr.rel (%p61) target = $region21
    $region20: #{tpu_custom_call.1} parent=1 // pred_region
      %64 = vst [vmem:[#allocation2] sm:$0xff] 0.0
    $region21: #{tpu_custom_call.1} parent=1 // pred_fallthru
      _
    %v65 = vld [vmem:[#allocation3] sm:$0xff]
    %v66 = vld [vmem:[#allocation3 + $0x8] sm:$0xff]
    %v67 = vld [vmem:[#allocation6] sm:$0xff]
    %v68 = vld [vmem:[#allocation6 + $0x8] sm:$0xff]
    %v69 = vand.u32 2147483647, %v65
    %v70 = vand.u32 2147483647, %v66
    %v71 = vsub.f32 0.0, %v69
    %v72 = vsub.f32 0.0, %v70
    %v73 = vmul.f32 %v71, 1.442695
    %v74 = vpow.pop %v73
    %v75 = vmul.f32 %v72, 1.442695
    %v76 = vpow.pop %v75
    %vm77 = vcmp.ge.f32.partialorder %v65, 0.0
    %vm78 = vcmp.ge.f32.partialorder %v66, 0.0
    %v79 = vsel %vm77, %v74, 1.0
    %v80 = vsel %vm78, %v76, 1.0
    %v81 = vadd.f32 %v74, 1.0
    %v82 = vadd.f32 %v76, 1.0
    %v83 = vrcp.pop %v81
    %v84 = vmul.f32 %v79, %v83
    %v85 = vrcp.pop %v82
    %v86 = vmul.f32 %v80, %v85
    %v87 = vmax.f32 %v65, 0.0
    %v88 = vmax.f32 %v66, 0.0
    %v89 = vmul.f32 %v65, %v67
    %v90 = vmul.f32 %v66, %v68
    %v91 = vsub.f32 %v87, %v89
    %v92 = vsub.f32 %v88, %v90
    %v93 = vadd.f32 %v74, 1.0
    %v94 = vlog2.pop %v93
    %v95 = vmul.f32 %v94, 0.6931472
    %v96 = vmul.f32 -0.5, %v74
    %v97 = vadd.f32 %v96, 1.0
    %v98 = vmul.f32 %v97, %v74
    %v99 = vand.u32 2147483647, %v74
    %vm100 = vcmp.lt.f32.partialorder %v99, 0.0004427343
    %v101 = vsel %vm100, %v98, %v95
    %v102 = vadd.f32 %v76, 1.0
    %v103 = vlog2.pop %v102
    %v104 = vmul.f32 %v103, 0.6931472
    %v105 = vmul.f32 -0.5, %v76
    %v106 = vadd.f32 %v105, 1.0
    %v107 = vmul.f32 %v106, %v76
    %v108 = vand.u32 2147483647, %v76
    %vm109 = vcmp.lt.f32.partialorder %v108, 0.0004427343
    %v110 = vsel %vm109, %v107, %v104
    %v111 = vadd.f32 %v91, %v101
    %v112 = vadd.f32 %v92, %v110
    %v113 = vmul.f32 %v84, %v84
    %v114 = vmul.f32 %v86, %v86
    %v115 = vmul.f32 %v113, %v111
    %v116 = vmul.f32 %v114, %v112
    %s117 = sadd.s32 0, 0
    %p118 = scmp.lt.s32.totalorder %s117, 1
    // Predicated region
    $region22: #{tpu_custom_call.1} parent=1 // pred_check
      %p119 = pneg %p118
    $region23: #{tpu_custom_call.1} parent=1 // pred_check_branch
      %121 = sbr.rel (%p119) target = $region25
    $region24: #{tpu_custom_call.1} parent=1 // pred_region
      %v122 = vld [vmem:[#allocation2] sm:$0xff]
      %v123 = vadd.f32 %v115, %v116
      %v124 = vadd.f32 %v122, %v123
      %125 = vst [vmem:[#allocation2] sm:$0xff] %v124
    $region25: #{tpu_custom_call.1} parent=1 // pred_fallthru
      _
    %p126 = scmp.ge.s32.totalorder %s117, 1
    // Predicated region
    $region26: #{tpu_custom_call.1} parent=1 // pred_check
      %p127 = pneg %p126
    $region27: #{tpu_custom_call.1} parent=1 // pred_check_branch
      %129 = sbr.rel (%p127) target = $region29
    $region28: #{tpu_custom_call.1} parent=1 // pred_region
      %v130 = vlaneseq
      %v131 = vshrl.u32 %v130, 7
      %v132 = vadd.s32 %v131, 8
      %s133 = smul.u32 %s117, 16
      %v134 = vstv %s133
      %v135 = vadd.s32 %v134, %v131
      %v136 = vadd.s32 %v134, %v132
      %vm137 = vcmp.lt.s32.totalorder %v135, 16
      %vm138 = vcmp.lt.s32.totalorder %v136, 16
      %v139 = vsel %vm137, %v115, 0.0
      %v140 = vsel %vm138, %v116, 0.0
      %v141 = vld [vmem:[#allocation2] sm:$0xff]
      %v142 = vadd.f32 %v139, %v140
      %v143 = vadd.f32 %v141, %v142
      %144 = vst [vmem:[#allocation2] sm:$0xff] %v143
    $region29: #{tpu_custom_call.1} parent=1 // pred_fallthru
      _
    // Predicated region
    $region30: #{tpu_custom_call.1} parent=1 // pred_check
      %p145 = pneg %p60
    $region31: #{tpu_custom_call.1} parent=1 // pred_check_branch
      %147 = sbr.rel (%p145) target = $region33
    $region32: #{tpu_custom_call.1} parent=1 // pred_region
      %v148 = vld [vmem:[#allocation2] sm:$0xff]
      %149 = vst [vmem:[#allocation8] sm:$0xff] %v148
    $region33: #{tpu_custom_call.1} parent=1 // pred_fallthru
      _
    // Predicated region
    $region34: #{tpu_custom_call.1} parent=1 // pred_check
      _
    $region35: #{tpu_custom_call.1} parent=1 // pred_check_branch
      %151 = sbr.rel (0) target = $region37
    $region36: #{tpu_custom_call.1} parent=1 // pred_region
      %s153 = ssub.s32 128, 128
      %154 = vsyncadd [#allocation5], %s153
      %s156 = sshll.u32 [#allocation8], 4
      %s157 = int_to_ptr.vmem [resolvable:$true] %s156
      %159 = dma.vmem_to_hbm [thread:$0]  %s157, 128, %s2, [#allocation5]
    $region37: #{tpu_custom_call.1} parent=1 // pred_fallthru
      _
    // Predicated region
    $region38: #{tpu_custom_call.1} parent=1 // pred_check
      _
    $region39: #{tpu_custom_call.1} parent=1 // pred_check_branch
      %161 = sbr.rel (0) target = $region41
    $region40: #{tpu_custom_call.1} parent=1 // pred_region
      %162 = dma.done [#allocation5], 128
    $region41: #{tpu_custom_call.1} parent=1 // pred_fallthru
      _
    %163 = vsyncpa [#allocation4], 1
    %164 = vsyncpa [#allocation7], 1
    %165 = vsyncpa [#allocation5], 1

</llo_original>
